<compile_context>
chip_gen: v7x
topology: tpu7x:2x2x1
jax: 0.10.0
libtpu: 0.0.40
codegen_flags: <defaults>
</compile_context>

<pallas_src>
import jax
import jax.numpy as jnp
from jax.experimental import pallas as pl
from jax.experimental.pallas import tpu as pltpu


# ---------------------------------------------------------------------------
# Static helpers
# ---------------------------------------------------------------------------
def _live_shifts(K, dil, pad_left, L):
    """Taps whose window intersects [0, L); returns (tap_indices, lane_shifts)."""
    taps, shifts = [], []
    for k in range(K):
        s = pad_left - k * dil          # output t reads input t - s
        if -L < s < L:                  # otherwise the tap is entirely padding
            taps.append(k)
            shifts.append(s)
    return taps, shifts


def _blpad(B, L):
    return max(128, ((B * L + 127) // 128) * 128)


# ---------------------------------------------------------------------------
# In-kernel building block: one Conv1d on batch-folded, lane-padded activations
# ---------------------------------------------------------------------------
def _conv(x, w_ref, b_ref, t_pos, *, L, BLpad, shifts, act, slope=0.2):
    """Conv1d on (C_in, BLpad) activations; columns built in-register.

    x:      (C_in, BLpad) f32, lane l = b*L + t (pad lanes carry junk, discarded)
    w_ref:  (n_live_taps, C_out, C_in) bf16 per-tap weight slices
    b_ref:  (C_out, 1) f32 bias
    t_pos:  (1, BLpad) int32, lane position modulo L (hoisted, from wrapper)
    shifts: static per-tap lane shifts s = pad_left - k*dil (live taps only)
    """
    acc = None
    for j, s in enumerate(shifts):
        if s == 0:
            col = x
        else:
            lo, hi = max(0, s), min(L, L + s)
            mask = (t_pos >= lo) & (t_pos < hi)   # causal zero-pad + batch isolation
            col = jnp.where(mask, pltpu.roll(x, s % BLpad, axis=1), 0.0)
        part = jnp.dot(w_ref[j], col.astype(jnp.bfloat16),
                       preferred_element_type=jnp.float32)
        acc = part if acc is None else acc + part
    out = acc + b_ref[...]                        # (C_out, 1) lane broadcast
    if act == "relu":
        out = jnp.maximum(out, 0.0)
    elif act == "leaky":
        out = jnp.where(out > 0.0, out, slope * out)
    return out


# ---------------------------------------------------------------------------
# Fused discriminator kernel: conv stack + LeakyReLU + flatten + Linear + Sigmoid
# ---------------------------------------------------------------------------
def _make_disc_kernel(layer_shifts, L, BLpad, slope):
    n_layers = len(layer_shifts)

    def kernel(x_ref, t_ref, *refs):
        # refs = (w0, b0, ..., w_{n-1}, b_{n-1}, fcw_tiled, fcb, onehot, o_ref)
        o_ref = refs[-1]
        onehot_ref = refs[-2]
        fcb_ref = refs[-3]
        fcw_ref = refs[-4]

        t_pos = t_ref[...]
        x = x_ref[...]
        for i in range(n_layers):
            x = _conv(x, refs[2 * i], refs[2 * i + 1], t_pos,
                      L=L, BLpad=BLpad, shifts=layer_shifts[i],
                      act="leaky", slope=slope)

        # fused flatten(1) + Linear(C_last*L -> 1) + Sigmoid, lane-dense:
        #   one VPU multiply, one sublane reduce, one (1,BLpad)@(BLpad,B) matmul.
        s = jnp.sum(x * fcw_ref[...], axis=0, keepdims=True)          # (1, BLpad)
        z = jnp.dot(s, onehot_ref[...],
                    preferred_element_type=jnp.float32) + fcb_ref[...]  # (1, B)
        o_ref[...] = 1.0 / (1.0 + jnp.exp(-z))                        # sigmoid
    return kernel


# ---------------------------------------------------------------------------
# Fused generator kernel: full TemporalConvNet (all TemporalBlocks)
# ---------------------------------------------------------------------------
def _make_gen_kernel(block_cfgs, L, BLpad):
    # block_cfgs: list of (shifts, has_downsample)
    def kernel(x_ref, t_ref, *refs):
        o_ref = refs[-1]
        w = refs[:-1]
        t_pos = t_ref[...]
        x = x_ref[...]

        idx = 0
        for (shifts, has_down) in block_cfgs:
            h = _conv(x, w[idx], w[idx + 1], t_pos, L=L, BLpad=BLpad,
                      shifts=shifts, act="relu")
            h = _conv(h, w[idx + 2], w[idx + 3], t_pos, L=L, BLpad=BLpad,
                      shifts=shifts, act="relu")
            idx += 4
            if has_down:                      # 1x1 downsample conv on residual
                res = _conv(x, w[idx], w[idx + 1], t_pos, L=L, BLpad=BLpad,
                            shifts=[0], act="none")
                idx += 2
            else:
                res = x
            x = jnp.maximum(h + res, 0.0)     # TemporalBlock residual + ReLU

        o_ref[...] = x                        # one lane-dense (C_last, BLpad) store
    return kernel


# ---------------------------------------------------------------------------
# Model (parameter construction + wrapper-side layout plumbing)
# ---------------------------------------------------------------------------
class TCNGANPallas:
    def __init__(self, num_features, seq_len, batch_size, generator_channels,
                 discriminator_channels, generator_kernel_size=7,
                 discriminator_kernel_size=3, dropout=0.2, *, key):
        self.num_features = num_features
        self.seq_len = seq_len
        self.batch_size = batch_size
        self.gen_k = generator_kernel_size
        self.disc_k = discriminator_kernel_size
        self.disc_pad = 1   # TCNGAN hard-codes padding=1 for the discriminator
        # fused kernel assumes 'same'-length discriminator convs (true for k=3)
        assert 2 * self.disc_pad == self.disc_k - 1

        gen_channels = list(generator_channels) + [num_features]  # mirrors .append
        keys = iter(jax.random.split(key, 256))

        def init_w(shape, scale=0.1):
            return scale * jax.random.normal(next(keys), shape, jnp.float32)

        def tapped(w, taps):   # torch (C_out, C_in, K) -> (n_live, C_out, C_in) bf16
            return jnp.stack([w[:, :, k] for k in taps],
                             axis=0).astype(jnp.bfloat16)

        # ---- generator: TemporalConvNet blocks (causal pad + chomp == left pad) ---
        self.gen_blocks, self.gen_cfg = [], []
        for i, out_ch in enumerate(gen_channels):
            in_ch = num_features if i == 0 else gen_channels[i - 1]
            dil = 2 ** i
            pad = (self.gen_k - 1) * dil
            taps, shifts = _live_shifts(self.gen_k, dil, pad, seq_len)
            has_down = in_ch != out_ch
            blk = {
                "w1": tapped(init_w((out_ch, in_ch, self.gen_k)), taps),
                "b1": init_w((out_ch, 1)),
                "w2": tapped(init_w((out_ch, out_ch, self.gen_k)), taps),
                "b2": init_w((out_ch, 1)),
                "wd": tapped(init_w((out_ch, in_ch, 1)), [0]) if has_down else None,
                "bd": init_w((out_ch, 1)) if has_down else None,
            }
            self.gen_blocks.append(blk)
            self.gen_cfg.append((shifts, has_down))

        # ---- discriminator: Conv1d stack (+LeakyReLU) + Linear head ----
        self.disc_chans = [num_features] + list(discriminator_channels)
        d_taps, d_shifts = _live_shifts(self.disc_k, 1, self.disc_pad, seq_len)
        self.disc_shifts = d_shifts
        self.disc_convs = []
        for i in range(len(discriminator_channels)):
            in_ch, out_ch = self.disc_chans[i], self.disc_chans[i + 1]
            self.disc_convs.append(
                (tapped(init_w((out_ch, in_ch, self.disc_k)), d_taps),
                 init_w((out_ch, 1))))
        c_last = self.disc_chans[-1]
        # Linear(c_last*seq_len -> 1): weight as (c_last, L) == torch row-major
        # flatten order; tiled across batch lanes at call time.
        self.fc_w = init_w((c_last, seq_len))
        self.fc_b = init_w((1, 1))

    # --- discriminator path (default) ---
    def discriminator_forward(self, X):
        B = X.shape[0]
        L = self.seq_len
        C0 = self.disc_chans[0]
        BL = B * L
        BLpad = _blpad(B, L)

        # fold (B, L, C) -> lane-dense (C, B*L) slab, zero-padded to BLpad lanes
        x = jnp.transpose(X.astype(jnp.float32), (2, 0, 1)).reshape(C0, BL)
        x = jnp.pad(x, ((0, 0), (0, BLpad - BL)))
        t_pos = (jnp.arange(BLpad, dtype=jnp.int32) % L).reshape(1, BLpad)

        fcw_tiled = jnp.pad(jnp.tile(self.fc_w, (1, B)),
                            ((0, 0), (0, BLpad - BL)))                # (C_last,BLpad)
        lane = jnp.arange(BLpad)
        onehot = (((lane[:, None] // L) == jnp.arange(B)[None, :])
                  & (lane[:, None] < BL)).astype(jnp.float32)         # (BLpad, B)

        args = [x, t_pos]
        for w, b in self.disc_convs:
            args += [w, b]
        args += [fcw_tiled, self.fc_b, onehot]

        layer_shifts = [self.disc_shifts] * len(self.disc_convs)
        kernel = _make_disc_kernel(layer_shifts, L, BLpad, slope=0.2)
        vmem = pl.BlockSpec(memory_space=pltpu.MemorySpace.VMEM)
        out = pl.pallas_call(
            kernel,
            out_shape=jax.ShapeDtypeStruct((1, B), jnp.float32),
            in_specs=[vmem] * len(args),
            out_specs=vmem,
        )(*args)
        return out.reshape(B, 1)

    # --- generator path ---
    def generator_forward(self, key):
        B, L, F = self.batch_size, self.seq_len, self.num_features
        BL = B * L
        BLpad = _blpad(B, L)
        c_last = self.num_features

        noise = jax.random.normal(key, (B, L, F), jnp.float32)
        x = jnp.transpose(noise, (2, 0, 1)).reshape(F, BL)             # (F, B*L)
        x = jnp.pad(x, ((0, 0), (0, BLpad - BL)))
        t_pos = (jnp.arange(BLpad, dtype=jnp.int32) % L).reshape(1, BLpad)

        args = [x, t_pos]
        for blk in self.gen_blocks:
            args += [blk["w1"], blk["b1"], blk["w2"], blk["b2"]]
            if blk["wd"] is not None:
                args += [blk["wd"], blk["bd"]]

        kernel = _make_gen_kernel(self.gen_cfg, L, BLpad)
        vmem = pl.BlockSpec(memory_space=pltpu.MemorySpace.VMEM)
        out = pl.pallas_call(
            kernel,
            out_shape=jax.ShapeDtypeStruct((c_last, BLpad), jnp.float32),
            in_specs=[vmem] * len(args),
            out_specs=vmem,
        )(*args)
        out = out[:, :BL].reshape(c_last, B, L)
        return jnp.transpose(out, (1, 2, 0))                           # (B, L, F)

    def __call__(self, X, obj="discriminator", key=None):
        assert obj in ("generator", "discriminator"), \
            "obj must be either generator or discriminator"
        if obj == "generator":
            return self.generator_forward(key)
        return self.discriminator_forward(X)


# ---------------------------------------------------------------------------
if __name__ == "__main__":
    root = jax.random.PRNGKey(0)
    k_param, k_x, k_noise = jax.random.split(root, 3)

    num_features, seq_len, batch = 4, 16, 2
    model = TCNGANPallas(
        num_features=num_features, seq_len=seq_len, batch_size=batch,
        generator_channels=[8, 8], discriminator_channels=[8, 8],
        generator_kernel_size=7, discriminator_kernel_size=3,
        dropout=0.2, key=k_param)

    X = jax.random.normal(k_x, (batch, seq_len, num_features), jnp.float32)

    d_out = model(X, obj="discriminator")
    g_out = model(None, obj="generator", key=k_noise)
    jax.block_until_ready(d_out)
    jax.block_until_ready(g_out)

    assert d_out.shape == (batch, 1)
    assert g_out.shape == (batch, seq_len, num_features)
    assert bool(jnp.all((d_out >= 0.0) & (d_out <= 1.0)))
    assert bool(jnp.all(jnp.isfinite(g_out)))
    print("KERNEL_OK")
</pallas_src>

<mosaic_0001>
module attributes {stable_mosaic.version = 11 : i64} {
  func.func @kernel(%arg0: memref<4x128xf32, #tpu.memory_space<vmem>>, %arg1: memref<1x128xi32, #tpu.memory_space<vmem>>, %arg2: memref<3x8x4xbf16, #tpu.memory_space<vmem>>, %arg3: memref<8x1xf32, #tpu.memory_space<vmem>>, %arg4: memref<3x8x8xbf16, #tpu.memory_space<vmem>>, %arg5: memref<8x1xf32, #tpu.memory_space<vmem>>, %arg6: memref<8x128xf32, #tpu.memory_space<vmem>>, %arg7: memref<1x1xf32, #tpu.memory_space<vmem>>, %arg8: memref<128x2xf32, #tpu.memory_space<vmem>>, %arg9: memref<1x2xf32, #tpu.memory_space<vmem>>) attributes {dimension_semantics = [], scalar_prefetch = 0 : i64, scratch_operands = 0 : i64, tpu.core_type = #tpu.core_type<tc>} {
    %c0 = arith.constant 0 : index
    %c0_0 = arith.constant 0 : index
    %0 = vector.load %arg1[%c0, %c0_0] : memref<1x128xi32, #tpu.memory_space<vmem>>, vector<1x128xi32>
    %c0_1 = arith.constant 0 : index
    %c0_2 = arith.constant 0 : index
    %1 = vector.load %arg0[%c0_1, %c0_2] : memref<4x128xf32, #tpu.memory_space<vmem>>, vector<4x128xf32>
    %c1_i32 = arith.constant 1 : i32
    %2 = vector.broadcast %c1_i32 : i32 to vector<1x128xi32>
    %3 = arith.cmpi sge, %0, %2 : vector<1x128xi32>
    %c16_i32 = arith.constant 16 : i32
    %4 = vector.broadcast %c16_i32 : i32 to vector<1x128xi32>
    %5 = arith.cmpi slt, %0, %4 : vector<1x128xi32>
    %6 = arith.andi %3, %5 : vector<1x128xi1>
    %c1_i32_3 = arith.constant 1 : i32
    %7 = tpu.dynamic_rotate %1 by %c1_i32_3 dim 1 : vector<4x128xf32>, i32 -> vector<4x128xf32>
    %cst = arith.constant 0.000000e+00 : f32
    %8 = vector.shape_cast %6 : vector<1x128xi1> to vector<1x128xi1>
    %9 = vector.broadcast %8 : vector<1x128xi1> to vector<4x128xi1>
    %10 = vector.broadcast %cst : f32 to vector<4x128xf32>
    %11 = arith.select %9, %7, %10 : vector<4x128xi1>, vector<4x128xf32>
    %c0_4 = arith.constant 0 : index
    %c0_5 = arith.constant 0 : index
    %c0_6 = arith.constant 0 : index
    %12 = vector.load %arg2[%c0_4, %c0_5, %c0_6] : memref<3x8x4xbf16, #tpu.memory_space<vmem>>, vector<1x8x4xbf16>
    %13 = vector.shape_cast %12 : vector<1x8x4xbf16> to vector<8x4xbf16>
    %14 = arith.truncf %11 : vector<4x128xf32> to vector<4x128xbf16>
    %cst_7 = arith.constant dense<0.000000e+00> : vector<8x128xf32>
    %15 = tpu.matmul %13, %14, %cst_7 {dimension_numbers = #tpu.dot_dimension_numbers<[1], [0], [0], [1], [0, 0, 1, 1], [], []>} : vector<8x4xbf16>, vector<4x128xbf16>, vector<8x128xf32> -> vector<8x128xf32>
    %c1 = arith.constant 1 : index
    %c0_8 = arith.constant 0 : index
    %c0_9 = arith.constant 0 : index
    %16 = vector.load %arg2[%c1, %c0_8, %c0_9] : memref<3x8x4xbf16, #tpu.memory_space<vmem>>, vector<1x8x4xbf16>
    %17 = vector.shape_cast %16 : vector<1x8x4xbf16> to vector<8x4xbf16>
    %18 = arith.truncf %1 : vector<4x128xf32> to vector<4x128xbf16>
    %cst_10 = arith.constant dense<0.000000e+00> : vector<8x128xf32>
    %19 = tpu.matmul %17, %18, %cst_10 {dimension_numbers = #tpu.dot_dimension_numbers<[1], [0], [0], [1], [0, 0, 1, 1], [], []>} : vector<8x4xbf16>, vector<4x128xbf16>, vector<8x128xf32> -> vector<8x128xf32>
    %20 = arith.addf %15, %19 : vector<8x128xf32>
    %c0_i32 = arith.constant 0 : i32
    %21 = vector.broadcast %c0_i32 : i32 to vector<1x128xi32>
    %22 = arith.cmpi sge, %0, %21 : vector<1x128xi32>
    %c15_i32 = arith.constant 15 : i32
    %23 = vector.broadcast %c15_i32 : i32 to vector<1x128xi32>
    %24 = arith.cmpi slt, %0, %23 : vector<1x128xi32>
    %25 = arith.andi %22, %24 : vector<1x128xi1>
    %c127_i32 = arith.constant 127 : i32
    %26 = tpu.dynamic_rotate %1 by %c127_i32 dim 1 : vector<4x128xf32>, i32 -> vector<4x128xf32>
    %cst_11 = arith.constant 0.000000e+00 : f32
    %27 = vector.shape_cast %25 : vector<1x128xi1> to vector<1x128xi1>
    %28 = vector.broadcast %27 : vector<1x128xi1> to vector<4x128xi1>
    %29 = vector.broadcast %cst_11 : f32 to vector<4x128xf32>
    %30 = arith.select %28, %26, %29 : vector<4x128xi1>, vector<4x128xf32>
    %c2 = arith.constant 2 : index
    %c0_12 = arith.constant 0 : index
    %c0_13 = arith.constant 0 : index
    %31 = vector.load %arg2[%c2, %c0_12, %c0_13] : memref<3x8x4xbf16, #tpu.memory_space<vmem>>, vector<1x8x4xbf16>
    %32 = vector.shape_cast %31 : vector<1x8x4xbf16> to vector<8x4xbf16>
    %33 = arith.truncf %30 : vector<4x128xf32> to vector<4x128xbf16>
    %cst_14 = arith.constant dense<0.000000e+00> : vector<8x128xf32>
    %34 = tpu.matmul %32, %33, %cst_14 {dimension_numbers = #tpu.dot_dimension_numbers<[1], [0], [0], [1], [0, 0, 1, 1], [], []>} : vector<8x4xbf16>, vector<4x128xbf16>, vector<8x128xf32> -> vector<8x128xf32>
    %35 = arith.addf %20, %34 : vector<8x128xf32>
    %c0_15 = arith.constant 0 : index
    %c0_16 = arith.constant 0 : index
    %36 = vector.load %arg3[%c0_15, %c0_16] : memref<8x1xf32, #tpu.memory_space<vmem>>, vector<8x1xf32>
    %37 = vector.broadcast %36 : vector<8x1xf32> to vector<8x128xf32>
    %38 = arith.addf %35, %37 : vector<8x128xf32>
    %cst_17 = arith.constant 0.000000e+00 : f32
    %39 = vector.broadcast %cst_17 : f32 to vector<8x128xf32>
    %40 = arith.cmpf ogt, %38, %39 : vector<8x128xf32>
    %cst_18 = arith.constant 2.000000e-01 : f32
    %41 = vector.broadcast %cst_18 : f32 to vector<8x128xf32>
    %42 = arith.mulf %41, %38 : vector<8x128xf32>
    %43 = arith.select %40, %38, %42 : vector<8x128xi1>, vector<8x128xf32>
    %c1_i32_19 = arith.constant 1 : i32
    %44 = vector.broadcast %c1_i32_19 : i32 to vector<1x128xi32>
    %45 = arith.cmpi sge, %0, %44 : vector<1x128xi32>
    %c16_i32_20 = arith.constant 16 : i32
    %46 = vector.broadcast %c16_i32_20 : i32 to vector<1x128xi32>
    %47 = arith.cmpi slt, %0, %46 : vector<1x128xi32>
    %48 = arith.andi %45, %47 : vector<1x128xi1>
    %c1_i32_21 = arith.constant 1 : i32
    %49 = tpu.dynamic_rotate %43 by %c1_i32_21 dim 1 : vector<8x128xf32>, i32 -> vector<8x128xf32>
    %cst_22 = arith.constant 0.000000e+00 : f32
    %50 = vector.shape_cast %48 : vector<1x128xi1> to vector<1x128xi1>
    %51 = vector.broadcast %50 : vector<1x128xi1> to vector<8x128xi1>
    %52 = vector.broadcast %cst_22 : f32 to vector<8x128xf32>
    %53 = arith.select %51, %49, %52 : vector<8x128xi1>, vector<8x128xf32>
    %c0_23 = arith.constant 0 : index
    %c0_24 = arith.constant 0 : index
    %c0_25 = arith.constant 0 : index
    %54 = vector.load %arg4[%c0_23, %c0_24, %c0_25] : memref<3x8x8xbf16, #tpu.memory_space<vmem>>, vector<1x8x8xbf16>
    %55 = vector.shape_cast %54 : vector<1x8x8xbf16> to vector<8x8xbf16>
    %56 = arith.truncf %53 : vector<8x128xf32> to vector<8x128xbf16>
    %cst_26 = arith.constant dense<0.000000e+00> : vector<8x128xf32>
    %57 = tpu.matmul %55, %56, %cst_26 {dimension_numbers = #tpu.dot_dimension_numbers<[1], [0], [0], [1], [0, 0, 1, 1], [], []>} : vector<8x8xbf16>, vector<8x128xbf16>, vector<8x128xf32> -> vector<8x128xf32>
    %c1_27 = arith.constant 1 : index
    %c0_28 = arith.constant 0 : index
    %c0_29 = arith.constant 0 : index
    %58 = vector.load %arg4[%c1_27, %c0_28, %c0_29] : memref<3x8x8xbf16, #tpu.memory_space<vmem>>, vector<1x8x8xbf16>
    %59 = vector.shape_cast %58 : vector<1x8x8xbf16> to vector<8x8xbf16>
    %60 = arith.truncf %43 : vector<8x128xf32> to vector<8x128xbf16>
    %cst_30 = arith.constant dense<0.000000e+00> : vector<8x128xf32>
    %61 = tpu.matmul %59, %60, %cst_30 {dimension_numbers = #tpu.dot_dimension_numbers<[1], [0], [0], [1], [0, 0, 1, 1], [], []>} : vector<8x8xbf16>, vector<8x128xbf16>, vector<8x128xf32> -> vector<8x128xf32>
    %62 = arith.addf %57, %61 : vector<8x128xf32>
    %c0_i32_31 = arith.constant 0 : i32
    %63 = vector.broadcast %c0_i32_31 : i32 to vector<1x128xi32>
    %64 = arith.cmpi sge, %0, %63 : vector<1x128xi32>
    %c15_i32_32 = arith.constant 15 : i32
    %65 = vector.broadcast %c15_i32_32 : i32 to vector<1x128xi32>
    %66 = arith.cmpi slt, %0, %65 : vector<1x128xi32>
    %67 = arith.andi %64, %66 : vector<1x128xi1>
    %c127_i32_33 = arith.constant 127 : i32
    %68 = tpu.dynamic_rotate %43 by %c127_i32_33 dim 1 : vector<8x128xf32>, i32 -> vector<8x128xf32>
    %cst_34 = arith.constant 0.000000e+00 : f32
    %69 = vector.shape_cast %67 : vector<1x128xi1> to vector<1x128xi1>
    %70 = vector.broadcast %69 : vector<1x128xi1> to vector<8x128xi1>
    %71 = vector.broadcast %cst_34 : f32 to vector<8x128xf32>
    %72 = arith.select %70, %68, %71 : vector<8x128xi1>, vector<8x128xf32>
    %c2_35 = arith.constant 2 : index
    %c0_36 = arith.constant 0 : index
    %c0_37 = arith.constant 0 : index
    %73 = vector.load %arg4[%c2_35, %c0_36, %c0_37] : memref<3x8x8xbf16, #tpu.memory_space<vmem>>, vector<1x8x8xbf16>
    %74 = vector.shape_cast %73 : vector<1x8x8xbf16> to vector<8x8xbf16>
    %75 = arith.truncf %72 : vector<8x128xf32> to vector<8x128xbf16>
    %cst_38 = arith.constant dense<0.000000e+00> : vector<8x128xf32>
    %76 = tpu.matmul %74, %75, %cst_38 {dimension_numbers = #tpu.dot_dimension_numbers<[1], [0], [0], [1], [0, 0, 1, 1], [], []>} : vector<8x8xbf16>, vector<8x128xbf16>, vector<8x128xf32> -> vector<8x128xf32>
    %77 = arith.addf %62, %76 : vector<8x128xf32>
    %c0_39 = arith.constant 0 : index
    %c0_40 = arith.constant 0 : index
    %78 = vector.load %arg5[%c0_39, %c0_40] : memref<8x1xf32, #tpu.memory_space<vmem>>, vector<8x1xf32>
    %79 = vector.broadcast %78 : vector<8x1xf32> to vector<8x128xf32>
    %80 = arith.addf %77, %79 : vector<8x128xf32>
    %cst_41 = arith.constant 0.000000e+00 : f32
    %81 = vector.broadcast %cst_41 : f32 to vector<8x128xf32>
    %82 = arith.cmpf ogt, %80, %81 : vector<8x128xf32>
    %cst_42 = arith.constant 2.000000e-01 : f32
    %83 = vector.broadcast %cst_42 : f32 to vector<8x128xf32>
    %84 = arith.mulf %83, %80 : vector<8x128xf32>
    %85 = arith.select %82, %80, %84 : vector<8x128xi1>, vector<8x128xf32>
    %c0_43 = arith.constant 0 : index
    %c0_44 = arith.constant 0 : index
    %86 = vector.load %arg6[%c0_43, %c0_44] : memref<8x128xf32, #tpu.memory_space<vmem>>, vector<8x128xf32>
    %87 = arith.mulf %85, %86 : vector<8x128xf32>
    %cst_45 = arith.constant dense<0.000000e+00> : vector<128xf32>
    %88 = vector.multi_reduction <add>, %87, %cst_45 [0] : vector<8x128xf32> to vector<128xf32>
    %89 = vector.shape_cast %88 : vector<128xf32> to vector<1x128xf32>
    %c0_46 = arith.constant 0 : index
    %c0_47 = arith.constant 0 : index
    %90 = vector.load %arg8[%c0_46, %c0_47] : memref<128x2xf32, #tpu.memory_space<vmem>>, vector<128x2xf32>
    %cst_48 = arith.constant dense<0.000000e+00> : vector<1x2xf32>
    %91 = tpu.matmul %89, %90, %cst_48 {dimension_numbers = #tpu.dot_dimension_numbers<[1], [0], [0], [1], [0, 0, 1, 1], [], []>} : vector<1x128xf32>, vector<128x2xf32>, vector<1x2xf32> -> vector<1x2xf32>
    %c0_49 = arith.constant 0 : index
    %c0_50 = arith.constant 0 : index
    %92 = vector.load %arg7[%c0_49, %c0_50] : memref<1x1xf32, #tpu.memory_space<vmem>>, vector<1x1xf32>
    %93 = vector.broadcast %92 : vector<1x1xf32> to vector<1x2xf32>
    %94 = arith.addf %91, %93 : vector<1x2xf32>
    %cst_51 = arith.constant 0.000000e+00 : f32
    %95 = vector.broadcast %cst_51 : f32 to vector<1x2xf32>
    %96 = arith.subf %95, %94 : vector<1x2xf32>
    %97 = math.exp %96 : vector<1x2xf32>
    %cst_52 = arith.constant 1.000000e+00 : f32
    %98 = vector.broadcast %cst_52 : f32 to vector<1x2xf32>
    %99 = arith.addf %98, %97 : vector<1x2xf32>
    %cst_53 = arith.constant 1.000000e+00 : f32
    %100 = vector.broadcast %cst_53 : f32 to vector<1x2xf32>
    %101 = arith.divf %100, %99 : vector<1x2xf32>
    %c0_54 = arith.constant 0 : index
    %c0_55 = arith.constant 0 : index
    %102 = vector.load %arg9[%c0_54, %c0_55] : memref<1x2xf32, #tpu.memory_space<vmem>>, vector<1x2xf32>
    tpu.vector_store %arg9[%c0_54, %c0_55], %101 {strides = array<i32>} : memref<1x2xf32, #tpu.memory_space<vmem>>, vector<1x2xf32>,
    return
  }
}

</mosaic_0001>

<llo_original>
// kernel: tpu_custom_call.1
$region0: #{tpu_custom_call.1}
  #allocation0 [shape = 'u32[]', space=smem, size = 0x4, offset = 0x4, fixed_abs, tag = 'smem constant byte address 0x4 - core index']
  #allocation1 [shape = 'u32[144,128]{1,0:T(1,128)}', space=vmem, size = 0x12000, scoped, tag = 'internal scratch']
  #allocation2 [shape = 'f32[1,1]{1,0:T(1,128)S(1)}', space=vmem, size = 0x200, scoped, tag = 'scoped memory for tpu_custom_call.1']
  %s0 = inlined_call_operand.vmem [shape: f32[4,128], index: 0, kind: input, shape index: {}]
  %s1 = inlined_call_operand.vmem [shape: s32[1,128], index: 1, kind: input, shape index: {}]
  %s2 = inlined_call_operand.vmem [shape: bf16[3,8,4], index: 2, kind: input, shape index: {}]
  %s3 = inlined_call_operand.vmem [shape: f32[8,1], index: 3, kind: input, shape index: {}]
  %s4 = inlined_call_operand.vmem [shape: bf16[3,8,8], index: 4, kind: input, shape index: {}]
  %s5 = inlined_call_operand.vmem [shape: f32[8,1], index: 5, kind: input, shape index: {}]
  %s6 = inlined_call_operand.vmem [shape: f32[8,128], index: 6, kind: input, shape index: {}]
  %s7 = inlined_call_operand.<no memory space> [shape: f32[1,1], index: 7, kind: input, shape index: {}]
  %s8 = inlined_call_operand.vmem [shape: f32[128,2], index: 8, kind: input, shape index: {}]
  %s9 = inlined_call_operand.hbm [shape: f32[1,2], index: 9, kind: output, shape index: {}]
  %s10 = sld [smem:[#allocation0]]
  $region46: #{tpu_custom_call.1} parent=0
    _
  %s12 = ssub.s32 1, %s10
  %s13 = scalar_select 0, %s12, %s10
  %v14 = vstv %s7
  %15 = vst [vmem:[#allocation2] sm:$0x1] %v14
  $region1: #{tpu_custom_call.1} parent=0
    #allocation3 [shape = 'u8[512]{0}', space=vmem, size = 0x400, scoped, tag = 'output window, operand 0, single buffered']
    #allocation4 [shape = 's32[1]{0}', space=sflag, size = 0x4, scoped, tag = 'scoped memory for tpu_custom_call.1']
    %16 = vsyncpa [#allocation4], 0
    // Predicated region
    $region2: #{tpu_custom_call.1} parent=1 // pred_check
      _
    $region3: #{tpu_custom_call.1} parent=1 // pred_check_branch
      %18 = sbr.rel (0) target = $region5
    $region4: #{tpu_custom_call.1} parent=1 // pred_region
      _
    $region5: #{tpu_custom_call.1} parent=1 // pred_fallthru
      _
    // Predicated region
    $region6: #{tpu_custom_call.1} parent=1 // pred_check
      _
    $region7: #{tpu_custom_call.1} parent=1 // pred_check_branch
      %20 = sbr.rel (0) target = $region9
    $region8: #{tpu_custom_call.1} parent=1 // pred_region
      _
    $region9: #{tpu_custom_call.1} parent=1 // pred_fallthru
      _
    // Predicated region
    $region10: #{tpu_custom_call.1} parent=1 // pred_check
      _
    $region11: #{tpu_custom_call.1} parent=1 // pred_check_branch
      %22 = sbr.rel (0) target = $region13
    $region12: #{tpu_custom_call.1} parent=1 // pred_region
      _
    $region13: #{tpu_custom_call.1} parent=1 // pred_fallthru
      _
    // Predicated region
    $region14: #{tpu_custom_call.1} parent=1 // pred_check
      _
    $region15: #{tpu_custom_call.1} parent=1 // pred_check_branch
      %24 = sbr.rel (0) target = $region17
    $region16: #{tpu_custom_call.1} parent=1 // pred_region
      _
    $region17: #{tpu_custom_call.1} parent=1 // pred_fallthru
      _
    // Predicated region
    $region18: #{tpu_custom_call.1} parent=1 // pred_check
      _
    $region19: #{tpu_custom_call.1} parent=1 // pred_check_branch
      %26 = sbr.rel (0) target = $region21
    $region20: #{tpu_custom_call.1} parent=1 // pred_region
      _
    $region21: #{tpu_custom_call.1} parent=1 // pred_fallthru
      _
    // Predicated region
    $region22: #{tpu_custom_call.1} parent=1 // pred_check
      _
    $region23: #{tpu_custom_call.1} parent=1 // pred_check_branch
      %28 = sbr.rel (0) target = $region25
    $region24: #{tpu_custom_call.1} parent=1 // pred_region
      _
    $region25: #{tpu_custom_call.1} parent=1 // pred_fallthru
      _
    // Predicated region
    $region26: #{tpu_custom_call.1} parent=1 // pred_check
      _
    $region27: #{tpu_custom_call.1} parent=1 // pred_check_branch
      %30 = sbr.rel (0) target = $region29
    $region28: #{tpu_custom_call.1} parent=1 // pred_region
      _
    $region29: #{tpu_custom_call.1} parent=1 // pred_fallthru
      _
    // Predicated region
    $region30: #{tpu_custom_call.1} parent=1 // pred_check
      _
    $region31: #{tpu_custom_call.1} parent=1 // pred_check_branch
      %32 = sbr.rel (0) target = $region33
    $region32: #{tpu_custom_call.1} parent=1 // pred_region
      _
    $region33: #{tpu_custom_call.1} parent=1 // pred_fallthru
      _
    // Predicated region
    $region34: #{tpu_custom_call.1} parent=1 // pred_check
      _
    $region35: #{tpu_custom_call.1} parent=1 // pred_check_branch
      %34 = sbr.rel (0) target = $region37
    $region36: #{tpu_custom_call.1} parent=1 // pred_region
      _
    $region37: #{tpu_custom_call.1} parent=1 // pred_fallthru
      _
    %v36 = vld [vmem:[%s1] sm:$0x1]
    %v37 = vld [vmem:[%s0] sm:$0xf]
    %vm38 = vcmp.ge.s32.totalorder %v36, 1
    %vm39 = vcmp.lt.s32.totalorder %v36, 16
    %vm40 = vmand %vm38, %vm39
    %41 = vrot.lane.b32.xlu0 %v37, 1
    %v42 = vpop.permute.xlu0 %41
    %v43 = vsel %vm40, 1, 0
    %v44 = vlaneseq
    %v45 = vshrl.u32 %v44, 7
    %v46 = vsub.s32 0, %v45
    %v47 = vrot.slane %v43, %v46
    %vm48 = vcmp.eq.s32.totalorder %v47, 1
    %v49 = vsel %vm48, %v42, 0.0
    %v50 = vld [vmem:[%s2] sm:$0xf]
    %v51 = vpack.c.bf16 %v49, %v49
    %s52 = scalar_lea.vmem %s2, 4
    %v53 = vld [vmem:[%s52] sm:$0xf]
    %v54 = vpack.c.bf16 %v37, %v37
    %vm55 = vcmask 31744
    %v57 = vsel %vm55, %v53, 0
    %vm59 = vcmask 1041408
    %v61 = vsel %vm59, %v54, 0
    %63 = vmatprep.subr.bf16.mxu0 0
    %64 = vmatpush1.bf16.msra.mxu0 %v61
    %65 = vmatprep.subr.bf16.mxu0 0
    %66 = vmatpush1.bf16.msra.mxu0 0
    %67 = vmatprep.subr.bf16.mxu0 0
    %68 = vmatpush1.bf16.msra.mxu0 0
    %69 = vmatprep.subr.bf16.mxu0 0
    %70 = vmatpush1.bf16.msra.mxu0 0
    %71 = vmatprep.subr.bf16.mxu0 0
    %72 = vmatpush1.bf16.msra.mxu0 0
    %73 = vmatprep.subr.bf16.mxu0 0
    %74 = vmatpush1.bf16.msra.mxu0 0
    %75 = vmatprep.subr.bf16.mxu0 0
    %76 = vmatpush1.bf16.msra.mxu0 0
    %77 = vmatprep.subr.bf16.mxu0 0
    %78 = vmatpush1.bf16.msra.mxu0 0
    %79 = vmatprep.subr.bf16.mxu0 0
    %80 = vmatpush1.bf16.msra.mxu0 0
    %81 = vmatprep.subr.bf16.mxu0 0
    %82 = vmatpush1.bf16.msra.mxu0 0
    %83 = vmatprep.subr.bf16.mxu0 0
    %84 = vmatpush1.bf16.msra.mxu0 0
    %85 = vmatprep.subr.bf16.mxu0 0
    %86 = vmatpush1.bf16.msra.mxu0 0
    %87 = vmatprep.subr.bf16.mxu0 0
    %88 = vmatpush1.bf16.msra.mxu0 0
    %89 = vmatprep.subr.bf16.mxu0 0
    %90 = vmatpush1.bf16.msra.mxu0 0
    %91 = vmatprep.subr.bf16.mxu0 0
    %92 = vmatpush1.bf16.msra.mxu0 0
    %93 = vmatprep.subr.bf16.mxu0 0
    %94 = vmatpush1.bf16.msra.mxu0 0
    %95 = vmatprep.mubr.bf16.mxu0 0
    %96 = vmatmul.mubr.bf16.gmra.mrb[0].mxu0 %v57
    %v97 = vpop.f32.mrb[0].mxu0
    %v98 = vadd.f32 0.0, %v97
    %v99 = vpop.f32.mrb[0].mxu0
    %v100 = vpop.f32.mrb[0].mxu0
    %v101 = vpop.f32.mrb[0].mxu0
    %102 = vdwg.mxu0
    %v104 = vsel %vm55, %v50, 0
    %v107 = vsel %vm59, %v51, 0
    %109 = vmatprep.subr.bf16.mxu0 0
    %110 = vmatpush1.bf16.msra.mxu0 %v107
    %111 = vmatprep.subr.bf16.mxu0 0
    %112 = vmatpush1.bf16.msra.mxu0 0
    %113 = vmatprep.subr.bf16.mxu0 0
    %114 = vmatpush1.bf16.msra.mxu0 0
    %115 = vmatprep.subr.bf16.mxu0 0
    %116 = vmatpush1.bf16.msra.mxu0 0
    %117 = vmatprep.subr.bf16.mxu0 0
    %118 = vmatpush1.bf16.msra.mxu0 0
    %119 = vmatprep.subr.bf16.mxu0 0
    %120 = vmatpush1.bf16.msra.mxu0 0
    %121 = vmatprep.subr.bf16.mxu0 0
    %122 = vmatpush1.bf16.msra.mxu0 0
    %123 = vmatprep.subr.bf16.mxu0 0
    %124 = vmatpush1.bf16.msra.mxu0 0
    %125 = vmatprep.subr.bf16.mxu0 0
    %126 = vmatpush1.bf16.msra.mxu0 0
    %127 = vmatprep.subr.bf16.mxu0 0
    %128 = vmatpush1.bf16.msra.mxu0 0
    %129 = vmatprep.subr.bf16.mxu0 0
    %130 = vmatpush1.bf16.msra.mxu0 0
    %131 = vmatprep.subr.bf16.mxu0 0
    %132 = vmatpush1.bf16.msra.mxu0 0
    %133 = vmatprep.subr.bf16.mxu0 0
    %134 = vmatpush1.bf16.msra.mxu0 0
    %135 = vmatprep.subr.bf16.mxu0 0
    %136 = vmatpush1.bf16.msra.mxu0 0
    %137 = vmatprep.subr.bf16.mxu0 0
    %138 = vmatpush1.bf16.msra.mxu0 0
    %139 = vmatprep.subr.bf16.mxu0 0
    %140 = vmatpush1.bf16.msra.mxu0 0
    %141 = vmatprep.mubr.bf16.mxu0 0
    %142 = vmatmul.mubr.bf16.gmra.mrb[0].mxu0 %v104
    %v143 = vpop.f32.mrb[0].mxu0
    %v144 = vadd.f32 %v98, %v143
    %v145 = vpop.f32.mrb[0].mxu0
    %v146 = vpop.f32.mrb[0].mxu0
    %v147 = vpop.f32.mrb[0].mxu0
    %148 = vdwg.mxu0
    %vm149 = vcmp.ge.s32.totalorder %v36, 0
    %vm150 = vcmp.lt.s32.totalorder %v36, 15
    %vm151 = vmand %vm149, %vm150
    %152 = vrot.lane.b32.xlu0 %v37, 127
    %v153 = vpop.permute.xlu0 %152
    %v154 = vsel %vm151, 1, 0
    %v155 = vlaneseq
    %v156 = vshrl.u32 %v155, 7
    %v157 = vsub.s32 0, %v156
    %v158 = vrot.slane %v154, %v157
    %vm159 = vcmp.eq.s32.totalorder %v158, 1
    %v160 = vsel %vm159, %v153, 0.0
    %s161 = scalar_lea.vmem %s2, 8
    %v162 = vld [vmem:[%s161] sm:$0xf]
    %v163 = vpack.c.bf16 %v160, %v160
    %v165 = vsel %vm55, %v162, 0
    %v168 = vsel %vm59, %v163, 0
    %170 = vmatprep.subr.bf16.mxu0 0
    %171 = vmatpush1.bf16.msra.mxu0 %v168
    %172 = vmatprep.subr.bf16.mxu0 0
    %173 = vmatpush1.bf16.msra.mxu0 0
    %174 = vmatprep.subr.bf16.mxu0 0
    %175 = vmatpush1.bf16.msra.mxu0 0
    %176 = vmatprep.subr.bf16.mxu0 0
    %177 = vmatpush1.bf16.msra.mxu0 0
    %178 = vmatprep.subr.bf16.mxu0 0
    %179 = vmatpush1.bf16.msra.mxu0 0
    %180 = vmatprep.subr.bf16.mxu0 0
    %181 = vmatpush1.bf16.msra.mxu0 0
    %182 = vmatprep.subr.bf16.mxu0 0
    %183 = vmatpush1.bf16.msra.mxu0 0
    %184 = vmatprep.subr.bf16.mxu0 0
    %185 = vmatpush1.bf16.msra.mxu0 0
    %186 = vmatprep.subr.bf16.mxu0 0
    %187 = vmatpush1.bf16.msra.mxu0 0
    %188 = vmatprep.subr.bf16.mxu0 0
    %189 = vmatpush1.bf16.msra.mxu0 0
    %190 = vmatprep.subr.bf16.mxu0 0
    %191 = vmatpush1.bf16.msra.mxu0 0
    %192 = vmatprep.subr.bf16.mxu0 0
    %193 = vmatpush1.bf16.msra.mxu0 0
    %194 = vmatprep.subr.bf16.mxu0 0
    %195 = vmatpush1.bf16.msra.mxu0 0
    %196 = vmatprep.subr.bf16.mxu0 0
    %197 = vmatpush1.bf16.msra.mxu0 0
    %198 = vmatprep.subr.bf16.mxu0 0
    %199 = vmatpush1.bf16.msra.mxu0 0
    %200 = vmatprep.subr.bf16.mxu0 0
    %201 = vmatpush1.bf16.msra.mxu0 0
    %202 = vmatprep.mubr.bf16.mxu0 0
    %203 = vmatmul.mubr.bf16.gmra.mrb[0].mxu0 %v165
    %v204 = vpop.f32.mrb[0].mxu0
    %v205 = vadd.f32 0.0, %v204
    %v206 = vpop.f32.mrb[0].mxu0
    %v207 = vpop.f32.mrb[0].mxu0
    %v208 = vpop.f32.mrb[0].mxu0
    %209 = vdwg.mxu0
    %v210 = vadd.f32 %v144, %v205
    %v211 = vld [vmem:[%s3] sm:$0xff]
    %213 = vset.pattern.permute.xlu0 0
    %214 = vperm.xlu0 %213, %v211
    %v215 = vpop.permute.xlu0 %214
    %v217 = vadd.f32 %v210, %v215
    %vm218 = vcmp.gt.f32.partialorder %v217, 0.0
    %v219 = vmul.f32 %v217, 0.2
    %v220 = vsel %vm218, %v217, %v219
    %221 = vrot.lane.b32.xlu0 %v220, 1
    %v222 = vpop.permute.xlu0 %221
    %v223 = vsel %vm48, %v222, 0.0
    %v224 = vld [vmem:[%s4] sm:$0xf]
    %v225 = vpack.c.bf16 %v223, %v223
    %s226 = scalar_lea.vmem %s4, 4
    %v227 = vld [vmem:[%s226] sm:$0xf]
    %v228 = vpack.c.bf16 %v220, %v220
    %vm229 = vcmask 64512
    %v231 = vsel %vm229, %v227, 0
    %vm233 = vcmask 1043456
    %v235 = vsel %vm233, %v228, 0
    %237 = vmatprep.subr.bf16.mxu0 0
    %238 = vmatpush1.bf16.msra.mxu0 %v235
    %239 = vmatprep.subr.bf16.mxu0 0
    %240 = vmatpush1.bf16.msra.mxu0 0
    %241 = vmatprep.subr.bf16.mxu0 0
    %242 = vmatpush1.bf16.msra.mxu0 0
    %243 = vmatprep.subr.bf16.mxu0 0
    %244 = vmatpush1.bf16.msra.mxu0 0
    %245 = vmatprep.subr.bf16.mxu0 0
    %246 = vmatpush1.bf16.msra.mxu0 0
    %247 = vmatprep.subr.bf16.mxu0 0
    %248 = vmatpush1.bf16.msra.mxu0 0
    %249 = vmatprep.subr.bf16.mxu0 0
    %250 = vmatpush1.bf16.msra.mxu0 0
    %251 = vmatprep.subr.bf16.mxu0 0
    %252 = vmatpush1.bf16.msra.mxu0 0
    %253 = vmatprep.subr.bf16.mxu0 0
    %254 = vmatpush1.bf16.msra.mxu0 0
    %255 = vmatprep.subr.bf16.mxu0 0
    %256 = vmatpush1.bf16.msra.mxu0 0
    %257 = vmatprep.subr.bf16.mxu0 0
    %258 = vmatpush1.bf16.msra.mxu0 0
    %259 = vmatprep.subr.bf16.mxu0 0
    %260 = vmatpush1.bf16.msra.mxu0 0
    %261 = vmatprep.subr.bf16.mxu0 0
    %262 = vmatpush1.bf16.msra.mxu0 0
    %263 = vmatprep.subr.bf16.mxu0 0
    %264 = vmatpush1.bf16.msra.mxu0 0
    %265 = vmatprep.subr.bf16.mxu0 0
    %266 = vmatpush1.bf16.msra.mxu0 0
    %267 = vmatprep.subr.bf16.mxu0 0
    %268 = vmatpush1.bf16.msra.mxu0 0
    %269 = vmatprep.mubr.bf16.mxu0 0
    %270 = vmatmul.mubr.bf16.gmra.mrb[0].mxu0 %v231
    %v271 = vpop.f32.mrb[0].mxu0
    %v272 = vadd.f32 0.0, %v271
    %v273 = vpop.f32.mrb[0].mxu0
    %v274 = vpop.f32.mrb[0].mxu0
    %v275 = vpop.f32.mrb[0].mxu0
    %276 = vdwg.mxu0
    %v278 = vsel %vm229, %v224, 0
    %v281 = vsel %vm233, %v225, 0
    %283 = vmatprep.subr.bf16.mxu0 0
    %284 = vmatpush1.bf16.msra.mxu0 %v281
    %285 = vmatprep.subr.bf16.mxu0 0
    %286 = vmatpush1.bf16.msra.mxu0 0
    %287 = vmatprep.subr.bf16.mxu0 0
    %288 = vmatpush1.bf16.msra.mxu0 0
    %289 = vmatprep.subr.bf16.mxu0 0
    %290 = vmatpush1.bf16.msra.mxu0 0
    %291 = vmatprep.subr.bf16.mxu0 0
    %292 = vmatpush1.bf16.msra.mxu0 0
    %293 = vmatprep.subr.bf16.mxu0 0
    %294 = vmatpush1.bf16.msra.mxu0 0
    %295 = vmatprep.subr.bf16.mxu0 0
    %296 = vmatpush1.bf16.msra.mxu0 0
    %297 = vmatprep.subr.bf16.mxu0 0
    %298 = vmatpush1.bf16.msra.mxu0 0
    %299 = vmatprep.subr.bf16.mxu0 0
    %300 = vmatpush1.bf16.msra.mxu0 0
    %301 = vmatprep.subr.bf16.mxu0 0
    %302 = vmatpush1.bf16.msra.mxu0 0
    %303 = vmatprep.subr.bf16.mxu0 0
    %304 = vmatpush1.bf16.msra.mxu0 0
    %305 = vmatprep.subr.bf16.mxu0 0
    %306 = vmatpush1.bf16.msra.mxu0 0
    %307 = vmatprep.subr.bf16.mxu0 0
    %308 = vmatpush1.bf16.msra.mxu0 0
    %309 = vmatprep.subr.bf16.mxu0 0
    %310 = vmatpush1.bf16.msra.mxu0 0
    %311 = vmatprep.subr.bf16.mxu0 0
    %312 = vmatpush1.bf16.msra.mxu0 0
    %313 = vmatprep.subr.bf16.mxu0 0
    %314 = vmatpush1.bf16.msra.mxu0 0
    %315 = vmatprep.mubr.bf16.mxu0 0
    %316 = vmatmul.mubr.bf16.gmra.mrb[0].mxu0 %v278
    %v317 = vpop.f32.mrb[0].mxu0
    %v318 = vadd.f32 %v272, %v317
    %v319 = vpop.f32.mrb[0].mxu0
    %v320 = vpop.f32.mrb[0].mxu0
    %v321 = vpop.f32.mrb[0].mxu0
    %322 = vdwg.mxu0
    %323 = vrot.lane.b32.xlu0 %v220, 127
    %v324 = vpop.permute.xlu0 %323
    %v325 = vsel %vm159, %v324, 0.0
    %s326 = scalar_lea.vmem %s4, 8
    %v327 = vld [vmem:[%s326] sm:$0xf]
    %v328 = vpack.c.bf16 %v325, %v325
    %v330 = vsel %vm229, %v327, 0
    %v333 = vsel %vm233, %v328, 0
    %335 = vmatprep.subr.bf16.mxu0 0
    %336 = vmatpush1.bf16.msra.mxu0 %v333
    %337 = vmatprep.subr.bf16.mxu0 0
    %338 = vmatpush1.bf16.msra.mxu0 0
    %339 = vmatprep.subr.bf16.mxu0 0
    %340 = vmatpush1.bf16.msra.mxu0 0
    %341 = vmatprep.subr.bf16.mxu0 0
    %342 = vmatpush1.bf16.msra.mxu0 0
    %343 = vmatprep.subr.bf16.mxu0 0
    %344 = vmatpush1.bf16.msra.mxu0 0
    %345 = vmatprep.subr.bf16.mxu0 0
    %346 = vmatpush1.bf16.msra.mxu0 0
    %347 = vmatprep.subr.bf16.mxu0 0
    %348 = vmatpush1.bf16.msra.mxu0 0
    %349 = vmatprep.subr.bf16.mxu0 0
    %350 = vmatpush1.bf16.msra.mxu0 0
    %351 = vmatprep.subr.bf16.mxu0 0
    %352 = vmatpush1.bf16.msra.mxu0 0
    %353 = vmatprep.subr.bf16.mxu0 0
    %354 = vmatpush1.bf16.msra.mxu0 0
    %355 = vmatprep.subr.bf16.mxu0 0
    %356 = vmatpush1.bf16.msra.mxu0 0
    %357 = vmatprep.subr.bf16.mxu0 0
    %358 = vmatpush1.bf16.msra.mxu0 0
    %359 = vmatprep.subr.bf16.mxu0 0
    %360 = vmatpush1.bf16.msra.mxu0 0
    %361 = vmatprep.subr.bf16.mxu0 0
    %362 = vmatpush1.bf16.msra.mxu0 0
    %363 = vmatprep.subr.bf16.mxu0 0
    %364 = vmatpush1.bf16.msra.mxu0 0
    %365 = vmatprep.subr.bf16.mxu0 0
    %366 = vmatpush1.bf16.msra.mxu0 0
    %367 = vmatprep.mubr.bf16.mxu0 0
    %368 = vmatmul.mubr.bf16.gmra.mrb[0].mxu0 %v330
    %v369 = vpop.f32.mrb[0].mxu0
    %v370 = vadd.f32 0.0, %v369
    %v371 = vpop.f32.mrb[0].mxu0
    %v372 = vpop.f32.mrb[0].mxu0
    %v373 = vpop.f32.mrb[0].mxu0
    %374 = vdwg.mxu0
    %v375 = vadd.f32 %v318, %v370
    %v376 = vld [vmem:[%s5] sm:$0xff]
    %378 = vset.pattern.permute.xlu0 0
    %379 = vperm.xlu0 %378, %v376
    %v380 = vpop.permute.xlu0 %379
    %v382 = vadd.f32 %v375, %v380
    %vm383 = vcmp.gt.f32.partialorder %v382, 0.0
    %v384 = vmul.f32 %v382, 0.2
    %v385 = vsel %vm383, %v382, %v384
    %v386 = vld [vmem:[%s6] sm:$0xff]
    %v387 = vmul.f32 %v385, %v386
    %v388 = vrot.slane %v387, 4
    %v389 = vadd.f32 %v387, %v388
    %v390 = vrot.slane %v389, 2
    %v391 = vadd.f32 %v389, %v390
    %v392 = vrot.slane %v391, 1
    %v393 = vadd.f32 %v391, %v392
    %v394 = vld [vmem:[%s8] sm:$0xff]
    %v395 = vld [vmem:[%s8 + $0x8] sm:$0xff]
    %v396 = vld [vmem:[%s8 + $0x10] sm:$0xff]
    %v397 = vld [vmem:[%s8 + $0x18] sm:$0xff]
    %v398 = vld [vmem:[%s8 + $0x20] sm:$0xff]
    %v399 = vld [vmem:[%s8 + $0x28] sm:$0xff]
    %v400 = vld [vmem:[%s8 + $0x30] sm:$0xff]
    %v401 = vld [vmem:[%s8 + $0x38] sm:$0xff]
    %v402 = vld [vmem:[%s8 + $0x40] sm:$0xff]
    %v403 = vld [vmem:[%s8 + $0x48] sm:$0xff]
    %v404 = vld [vmem:[%s8 + $0x50] sm:$0xff]
    %v405 = vld [vmem:[%s8 + $0x58] sm:$0xff]
    %v406 = vld [vmem:[%s8 + $0x60] sm:$0xff]
    %v407 = vld [vmem:[%s8 + $0x68] sm:$0xff]
    %v408 = vld [vmem:[%s8 + $0x70] sm:$0xff]
    %v409 = vld [vmem:[%s8 + $0x78] sm:$0xff]
    %v410 = vld [vmem:[#allocation2] sm:$0x1]
    %412 = vset.pattern.permute.xlu0 0
    %413 = vperm.xlu0 %412, %v410
    %v414 = vpop.permute.xlu0 %413
    %v416 = vlaneseq
    %v417 = vshrl.u32 %v416, 7
    %v418 = vsub.s32 0, %v417
    %v419 = vrot.slane %v414, %v418
    %420 = vmatprep.subr.mxu0 0.0
    %421 = vmatpush1.msra.mxu0 %v394
    %422 = vmatprep.subr.mxu0 0.0
    %423 = vmatpush1.msra.mxu0 %v395
    %424 = vmatprep.subr.mxu0 0.0
    %425 = vmatpush1.msra.mxu0 %v396
    %426 = vmatprep.subr.mxu0 0.0
    %427 = vmatpush1.msra.mxu0 %v397
    %428 = vmatprep.subr.mxu0 0.0
    %429 = vmatpush1.msra.mxu0 %v398
    %430 = vmatprep.subr.mxu0 0.0
    %431 = vmatpush1.msra.mxu0 %v399
    %432 = vmatprep.subr.mxu0 0.0
    %433 = vmatpush1.msra.mxu0 %v400
    %434 = vmatprep.subr.mxu0 0.0
    %435 = vmatpush1.msra.mxu0 %v401
    %436 = vmatprep.subr.mxu0 0.0
    %437 = vmatpush1.msra.mxu0 %v402
    %438 = vmatprep.subr.mxu0 0.0
    %439 = vmatpush1.msra.mxu0 %v403
    %440 = vmatprep.subr.mxu0 0.0
    %441 = vmatpush1.msra.mxu0 %v404
    %442 = vmatprep.subr.mxu0 0.0
    %443 = vmatpush1.msra.mxu0 %v405
    %444 = vmatprep.subr.mxu0 0.0
    %445 = vmatpush1.msra.mxu0 %v406
    %446 = vmatprep.subr.mxu0 0.0
    %447 = vmatpush1.msra.mxu0 %v407
    %448 = vmatprep.subr.mxu0 0.0
    %449 = vmatpush1.msra.mxu0 %v408
    %450 = vmatprep.subr.mxu0 0.0
    %451 = vmatpush1.msra.mxu0 %v409
    %452 = vmatprep.subr.mxu0 0.0
    %453 = vmatpush1.msra.mxu0 0.0
    %454 = vmatprep.subr.mxu0 0.0
    %455 = vmatpush1.msra.mxu0 0.0
    %456 = vmatprep.subr.mxu0 0.0
    %457 = vmatpush1.msra.mxu0 0.0
    %458 = vmatprep.subr.mxu0 0.0
    %459 = vmatpush1.msra.mxu0 0.0
    %460 = vmatprep.subr.mxu0 0.0
    %461 = vmatpush1.msra.mxu0 0.0
    %462 = vmatprep.subr.mxu0 0.0
    %463 = vmatpush1.msra.mxu0 0.0
    %464 = vmatprep.subr.mxu0 0.0
    %465 = vmatpush1.msra.mxu0 0.0
    %466 = vmatprep.subr.mxu0 0.0
    %467 = vmatpush1.msra.mxu0 0.0
    %468 = vmatprep.subr.mxu0 0.0
    %469 = vmatpush1.msra.mxu0 0.0
    %470 = vmatprep.subr.mxu0 0.0
    %471 = vmatpush1.msra.mxu0 0.0
    %472 = vmatprep.subr.mxu0 0.0
    %473 = vmatpush1.msra.mxu0 0.0
    %474 = vmatprep.subr.mxu0 0.0
    %475 = vmatpush1.msra.mxu0 0.0
    %476 = vmatprep.subr.mxu0 0.0
    %477 = vmatpush1.msra.mxu0 0.0
    %478 = vmatprep.subr.mxu0 0.0
    %479 = vmatpush1.msra.mxu0 0.0
    %480 = vmatprep.subr.mxu0 0.0
    %481 = vmatpush1.msra.mxu0 0.0
    %482 = vmatprep.subr.mxu0 0.0
    %483 = vmatpush1.msra.mxu0 0.0
    %484 = vmatprep.mubr.f32.mxu0 0.0
    %485 = vmatmul.mubr.f32.gmra.mrb[0].mxu0 %v393
    %v486 = vpop.f32.mrb[0].mxu0
    %v487 = vadd.f32 %v419, %v486
    %v488 = vpop.f32.mrb[0].mxu0
    %489 = vdwg.mxu0
    %v490 = vsub.f32 0.0, %v487
    %v491 = vmul.f32 %v490, 1.442695
    %v492 = vpow.pop %v491
    %v493 = vadd.f32 %v492, 1.0
    %v494 = vrcp.pop %v493
    %v495 = vmul.f32 1.0, %v494
    %vm496 = vcmask 8192
    %497 = vst.msk [vmem:[#allocation3] sm:$0x1] %vm496, %v495
    // Predicated region
    $region38: #{tpu_custom_call.1} parent=1 // pred_check
      _
    $region39: #{tpu_custom_call.1} parent=1 // pred_check_branch
      %499 = sbr.rel (0) target = $region41
    $region40: #{tpu_custom_call.1} parent=1 // pred_region
      %s501 = ssub.s32 16, 16
      %502 = vsyncadd [#allocation4], %s501
      %s504 = sshll.u32 [#allocation3], 4
      %s505 = int_to_ptr.vmem [resolvable:$true] %s504
      %507 = dma.vmem_to_hbm [thread:$0]  %s505, 16, %s9, [#allocation4]
    $region41: #{tpu_custom_call.1} parent=1 // pred_fallthru
      _
    // Predicated region
    $region42: #{tpu_custom_call.1} parent=1 // pred_check
      _
    $region43: #{tpu_custom_call.1} parent=1 // pred_check_branch
      %509 = sbr.rel (0) target = $region45
    $region44: #{tpu_custom_call.1} parent=1 // pred_region
      %510 = dma.done [#allocation4], 16
    $region45: #{tpu_custom_call.1} parent=1 // pred_fallthru
      _
    %511 = vsyncpa [#allocation4], 1

</llo_original>
